<compile_context>
chip_gen: v6e
topology: v6e:2x2x1
jax: 0.10.0
libtpu: 0.0.40
codegen_flags: <defaults>
</compile_context>

<pallas_src>
import jax
import jax.numpy as jnp
from jax.experimental import pallas as pl
from jax.experimental.pallas import tpu as pltpu


def encoder_block_kernel(x_ref, wqkvT_ref, woT_ref, vecs_ref, out_ref):
    x = x_ref[...]                       # (S, E) f32 -- last batch element only
    vec = vecs_ref[...]                  # (6, E): bq, bk, bv, bo, gamma*wl, c
    S, E = x.shape

    # --- fused QKV in-projection: one MXU matmul, then static slices.
    #     (1/sqrt(E) attention scale already folded into the q columns.)
    qkv = jnp.dot(x, wqkvT_ref[...], preferred_element_type=jnp.float32)  # (S, 3E)
    q = qkv[:, :E] + vec[0:1, :]
    k = qkv[:, E:2 * E] + vec[1:2, :]
    v = qkv[:, 2 * E:] + vec[2:3, :]

    # --- single-head scaled dot-product attention, softmax over keys ---
    s = jax.lax.dot_general(q, k, (((1,), (1,)), ((), ())),
                            preferred_element_type=jnp.float32)           # (S, S)
    s_max = jnp.max(s, axis=-1, keepdims=True)
    p = jnp.exp(s - s_max)
    p = p / jnp.sum(p, axis=-1, keepdims=True)                            # exact
    attn = jnp.dot(p, v, preferred_element_type=jnp.float32)              # (S, E)

    # --- output projection ---
    attn = jnp.dot(attn, woT_ref[...],
                   preferred_element_type=jnp.float32) + vec[3:4, :]

    # --- residual + LayerNorm(E) folded with Linear(E, 1):
    #     out = rsqrt(var+eps) * sum((h-mu)*(gamma*wl), -1) + (beta.wl + bl)
    h = attn + x
    mu = jnp.mean(h, axis=-1, keepdims=True)
    hc = h - mu
    var = jnp.mean(hc * hc, axis=-1, keepdims=True)
    out = (jnp.sum(hc * vec[4:5, :], axis=-1, keepdims=True)
           * jax.lax.rsqrt(var + 1e-5)
           + vec[5:6, 0:1])                                               # (S, 1)
    out_ref[...] = out.astype(out_ref.dtype)


def prepare_params(params, E):
    """One-time weight prep (NOT on the per-call path)."""
    scale = 1.0 / jnp.sqrt(jnp.float32(E))
    # Fused, pre-transposed QKV projection; attention scale folded into q.
    wqkvT = jnp.concatenate([(params['wq'] * scale).T,
                             params['wk'].T,
                             params['wv'].T], axis=1)                     # (E, 3E)
    woT = params['wo'].T                                                  # (E, E)
    # LayerNorm-affine + Linear(E,1) fold.
    gw = params['gamma'] * params['wl']                                   # (1, E)
    c = jnp.sum(params['beta'] * params['wl']) + params['bl'][0, 0]       # scalar
    vecs = jnp.concatenate([params['bq'] * scale,
                            params['bk'],
                            params['bv'],
                            params['bo'],
                            gw,
                            c * jnp.ones((1, E), jnp.float32)], axis=0)   # (6, E)
    return dict(wqkvT=wqkvT, woT=woT, vecs=vecs)


def transformer_encoder_block(x, prepped):
    """x: (B, S, E) float32.  Returns (S, 1) float32 (matches PyTorch module)."""
    B, S, E = x.shape
    return pl.pallas_call(
        encoder_block_kernel,
        out_shape=jax.ShapeDtypeStruct((S, 1), x.dtype),
        grid=(1,),
        in_specs=[
            # Dead-batch elimination folded into the BlockSpec: DMA only x[B-1].
            pl.BlockSpec((pl.Squeezed(), S, E), lambda i: (B - 1, 0, 0)),
            pl.BlockSpec((E, 3 * E), lambda i: (0, 0)),
            pl.BlockSpec((E, E), lambda i: (0, 0)),
            pl.BlockSpec((6, E), lambda i: (0, 0)),
        ],
        out_specs=pl.BlockSpec((S, 1), lambda i: (0, 0)),
        compiler_params=pltpu.CompilerParams(
            dimension_semantics=("arbitrary",)),
    )(x, prepped['wqkvT'], prepped['woT'], prepped['vecs'])


def make_params(key, E):
    ks = jax.random.split(key, 8)
    scale = 0.1
    return dict(
        wq=scale * jax.random.normal(ks[0], (E, E), jnp.float32),
        wk=scale * jax.random.normal(ks[1], (E, E), jnp.float32),
        wv=scale * jax.random.normal(ks[2], (E, E), jnp.float32),
        bq=scale * jax.random.normal(ks[3], (1, E), jnp.float32),
        bk=scale * jax.random.normal(ks[4], (1, E), jnp.float32),
        bv=scale * jax.random.normal(ks[5], (1, E), jnp.float32),
        wo=scale * jax.random.normal(ks[6], (E, E), jnp.float32),
        bo=jnp.zeros((1, E), jnp.float32),
        gamma=jnp.ones((1, E), jnp.float32),
        beta=jnp.zeros((1, E), jnp.float32),
        wl=scale * jax.random.normal(ks[7], (1, E), jnp.float32),
        bl=jnp.full((1, 1), 0.05, jnp.float32),
    )


def reference(x, p):
    """Pure-JAX reference mirroring the PyTorch forward (eval mode, full batch)."""
    B, S, E = x.shape
    q = jnp.einsum('bse,fe->bsf', x, p['wq']) + p['bq']
    k = jnp.einsum('bse,fe->bsf', x, p['wk']) + p['bk']
    v = jnp.einsum('bse,fe->bsf', x, p['wv']) + p['bv']
    s = jnp.einsum('bqe,bke->bqk', q, k) / jnp.sqrt(jnp.float32(E))
    pr = jax.nn.softmax(s, axis=-1)
    a = jnp.einsum('bqk,bke->bqe', pr, v)
    a = jnp.einsum('bse,fe->bsf', a, p['wo']) + p['bo']
    h = a + x
    mu = jnp.mean(h, axis=-1, keepdims=True)
    var = jnp.mean((h - mu) ** 2, axis=-1, keepdims=True)
    y = (h - mu) / jnp.sqrt(var + 1e-5) * p['gamma'] + p['beta']
    y_last = y[B - 1]
    return jnp.einsum('se,fe->sf', y_last, p['wl']) + p['bl']


if __name__ == "__main__":
    key = jax.random.PRNGKey(0)
    kx, kp = jax.random.split(key)

    B, S, E = 4, 8, 16        # batch, seq, embed (input_size = E, num_heads = 1)
    x = jax.random.normal(kx, (B, S, E), jnp.float32)
    params = make_params(kp, E)

    prepped = prepare_params(params, E)          # one-time weight prep
    fwd = jax.jit(transformer_encoder_block)     # per-call path = one jitted call

    out = fwd(x, prepped)
    out = jax.block_until_ready(out)

    ref = reference(x, params)
    assert out.shape == (S, 1), out.shape
    assert jnp.allclose(out, ref, atol=1e-4, rtol=1e-4), (out, ref)
    print("KERNEL_OK")
</pallas_src>

<mosaic_0001>
module attributes {stable_mosaic.version = 11 : i64} {
  func.func @encoder_block_kernel(%arg0: i32, %arg1: memref<1x8x16xf32, #tpu.memory_space<vmem>>, %arg2: memref<16x48xf32, #tpu.memory_space<vmem>>, %arg3: memref<16x16xf32, #tpu.memory_space<vmem>>, %arg4: memref<6x16xf32, #tpu.memory_space<vmem>>, %arg5: memref<8x1xf32, #tpu.memory_space<vmem>>) attributes {dimension_semantics = [#tpu.dimension_semantics<arbitrary>], iteration_bounds = array<i64: 1>, scalar_prefetch = 0 : i64, scratch_operands = 0 : i64, tpu.core_type = #tpu.core_type<tc>, window_params = [{transform_indices = @transform_0, window_bounds = array<i64: 1, 8, 16>}, {pipeline_mode = #tpu.pipeline_mode<synchronous>, transform_indices = @transform_1, window_bounds = array<i64: 16, 48>}, {pipeline_mode = #tpu.pipeline_mode<synchronous>, transform_indices = @transform_2, window_bounds = array<i64: 16, 16>}, {pipeline_mode = #tpu.pipeline_mode<synchronous>, transform_indices = @transform_3, window_bounds = array<i64: 6, 16>}, {pipeline_mode = #tpu.pipeline_mode<synchronous>, transform_indices = @transform_4, window_bounds = array<i64: 8, 1>}]} {
    %c0 = arith.constant 0 : index
    %c0_0 = arith.constant 0 : index
    %c0_1 = arith.constant 0 : index
    %0 = vector.load %arg1[%c0, %c0_0, %c0_1] : memref<1x8x16xf32, #tpu.memory_space<vmem>>, vector<1x8x16xf32>
    %1 = vector.shape_cast %0 : vector<1x8x16xf32> to vector<8x16xf32>
    %c0_2 = arith.constant 0 : index
    %c0_3 = arith.constant 0 : index
    %2 = vector.load %arg4[%c0_2, %c0_3] : memref<6x16xf32, #tpu.memory_space<vmem>>, vector<6x16xf32>
    %c0_4 = arith.constant 0 : index
    %c0_5 = arith.constant 0 : index
    %3 = vector.load %arg2[%c0_4, %c0_5] : memref<16x48xf32, #tpu.memory_space<vmem>>, vector<16x48xf32>
    %cst = arith.constant dense<0.000000e+00> : vector<8x48xf32>
    %4 = tpu.matmul %1, %3, %cst {dimension_numbers = #tpu.dot_dimension_numbers<[1], [0], [0], [1], [0, 0, 1, 1], [], []>} : vector<8x16xf32>, vector<16x48xf32>, vector<8x48xf32> -> vector<8x48xf32>
    %5 = vector.extract_strided_slice %4 {offsets = [0, 0], sizes = [8, 16], strides = [1, 1]} : vector<8x48xf32> to vector<8x16xf32>
    %6 = vector.extract_strided_slice %2 {offsets = [0, 0], sizes = [1, 16], strides = [1, 1]} : vector<6x16xf32> to vector<1x16xf32>
    %7 = vector.broadcast %6 : vector<1x16xf32> to vector<8x16xf32>
    %8 = arith.addf %5, %7 : vector<8x16xf32>
    %9 = vector.extract_strided_slice %4 {offsets = [0, 16], sizes = [8, 16], strides = [1, 1]} : vector<8x48xf32> to vector<8x16xf32>
    %10 = vector.extract_strided_slice %2 {offsets = [1, 0], sizes = [1, 16], strides = [1, 1]} : vector<6x16xf32> to vector<1x16xf32>
    %11 = vector.broadcast %10 : vector<1x16xf32> to vector<8x16xf32>
    %12 = arith.addf %9, %11 : vector<8x16xf32>
    %13 = vector.extract_strided_slice %4 {offsets = [0, 32], sizes = [8, 16], strides = [1, 1]} : vector<8x48xf32> to vector<8x16xf32>
    %14 = vector.extract_strided_slice %2 {offsets = [2, 0], sizes = [1, 16], strides = [1, 1]} : vector<6x16xf32> to vector<1x16xf32>
    %15 = vector.broadcast %14 : vector<1x16xf32> to vector<8x16xf32>
    %16 = arith.addf %13, %15 : vector<8x16xf32>
    %cst_6 = arith.constant dense<0.000000e+00> : vector<8x8xf32>
    %17 = tpu.matmul %8, %12, %cst_6 {dimension_numbers = #tpu.dot_dimension_numbers<[1], [1], [0], [0], [0, 0, 1, 0], [], []>} : vector<8x16xf32>, vector<8x16xf32>, vector<8x8xf32> -> vector<8x8xf32>
    %cst_7 = arith.constant dense<0xFF800000> : vector<8xf32>
    %18 = vector.multi_reduction <maximumf>, %17, %cst_7 [1] : vector<8x8xf32> to vector<8xf32>
    %19 = vector.shape_cast %18 : vector<8xf32> to vector<8x1xf32>
    %20 = vector.broadcast %19 : vector<8x1xf32> to vector<8x8xf32>
    %21 = arith.subf %17, %20 : vector<8x8xf32>
    %22 = math.exp %21 : vector<8x8xf32>
    %cst_8 = arith.constant dense<0.000000e+00> : vector<8xf32>
    %23 = vector.multi_reduction <add>, %22, %cst_8 [1] : vector<8x8xf32> to vector<8xf32>
    %24 = vector.shape_cast %23 : vector<8xf32> to vector<8x1xf32>
    %25 = vector.broadcast %24 : vector<8x1xf32> to vector<8x8xf32>
    %26 = arith.divf %22, %25 : vector<8x8xf32>
    %cst_9 = arith.constant dense<0.000000e+00> : vector<8x16xf32>
    %27 = tpu.matmul %26, %16, %cst_9 {dimension_numbers = #tpu.dot_dimension_numbers<[1], [0], [0], [1], [0, 0, 1, 1], [], []>} : vector<8x8xf32>, vector<8x16xf32>, vector<8x16xf32> -> vector<8x16xf32>
    %c0_10 = arith.constant 0 : index
    %c0_11 = arith.constant 0 : index
    %28 = vector.load %arg3[%c0_10, %c0_11] : memref<16x16xf32, #tpu.memory_space<vmem>>, vector<16x16xf32>
    %cst_12 = arith.constant dense<0.000000e+00> : vector<8x16xf32>
    %29 = tpu.matmul %27, %28, %cst_12 {dimension_numbers = #tpu.dot_dimension_numbers<[1], [0], [0], [1], [0, 0, 1, 1], [], []>} : vector<8x16xf32>, vector<16x16xf32>, vector<8x16xf32> -> vector<8x16xf32>
    %30 = vector.extract_strided_slice %2 {offsets = [3, 0], sizes = [1, 16], strides = [1, 1]} : vector<6x16xf32> to vector<1x16xf32>
    %31 = vector.broadcast %30 : vector<1x16xf32> to vector<8x16xf32>
    %32 = arith.addf %29, %31 : vector<8x16xf32>
    %33 = arith.addf %32, %1 : vector<8x16xf32>
    %cst_13 = arith.constant dense<0.000000e+00> : vector<8xf32>
    %34 = vector.multi_reduction <add>, %33, %cst_13 [1] : vector<8x16xf32> to vector<8xf32>
    %35 = vector.shape_cast %34 : vector<8xf32> to vector<8x1xf32>
    %cst_14 = arith.constant 1.600000e+01 : f32
    %36 = vector.broadcast %cst_14 : f32 to vector<8x1xf32>
    %37 = arith.divf %35, %36 : vector<8x1xf32>
    %38 = vector.broadcast %37 : vector<8x1xf32> to vector<8x16xf32>
    %39 = arith.subf %33, %38 : vector<8x16xf32>
    %40 = arith.mulf %39, %39 : vector<8x16xf32>
    %cst_15 = arith.constant dense<0.000000e+00> : vector<8xf32>
    %41 = vector.multi_reduction <add>, %40, %cst_15 [1] : vector<8x16xf32> to vector<8xf32>
    %42 = vector.shape_cast %41 : vector<8xf32> to vector<8x1xf32>
    %cst_16 = arith.constant 1.600000e+01 : f32
    %43 = vector.broadcast %cst_16 : f32 to vector<8x1xf32>
    %44 = arith.divf %42, %43 : vector<8x1xf32>
    %45 = vector.extract_strided_slice %2 {offsets = [4, 0], sizes = [1, 16], strides = [1, 1]} : vector<6x16xf32> to vector<1x16xf32>
    %46 = vector.broadcast %45 : vector<1x16xf32> to vector<8x16xf32>
    %47 = arith.mulf %39, %46 : vector<8x16xf32>
    %cst_17 = arith.constant dense<0.000000e+00> : vector<8xf32>
    %48 = vector.multi_reduction <add>, %47, %cst_17 [1] : vector<8x16xf32> to vector<8xf32>
    %49 = vector.shape_cast %48 : vector<8xf32> to vector<8x1xf32>
    %cst_18 = arith.constant 9.99999974E-6 : f32
    %50 = vector.broadcast %cst_18 : f32 to vector<8x1xf32>
    %51 = arith.addf %44, %50 : vector<8x1xf32>
    %52 = math.rsqrt %51 : vector<8x1xf32>
    %53 = arith.mulf %49, %52 : vector<8x1xf32>
    %54 = vector.extract_strided_slice %2 {offsets = [5, 0], sizes = [1, 1], strides = [1, 1]} : vector<6x16xf32> to vector<1x1xf32>
    %55 = vector.broadcast %54 : vector<1x1xf32> to vector<8x1xf32>
    %56 = arith.addf %53, %55 : vector<8x1xf32>
    %c0_19 = arith.constant 0 : index
    %c0_20 = arith.constant 0 : index
    %57 = vector.load %arg5[%c0_19, %c0_20] : memref<8x1xf32, #tpu.memory_space<vmem>>, vector<8x1xf32>
    tpu.vector_store %arg5[%c0_19, %c0_20], %56 {strides = array<i32>} : memref<8x1xf32, #tpu.memory_space<vmem>>, vector<8x1xf32>,
    return
  }
  func.func @transform_0(%arg0: i32) -> (i32, i32, i32) {
    %c3_i32 = arith.constant 3 : i32
    %c0_i32 = arith.constant 0 : i32
    %c0_i32_0 = arith.constant 0 : i32
    %c0_i32_1 = arith.constant 0 : i32
    return %c3_i32, %c0_i32, %c0_i32_0 : i32, i32, i32
  }
  func.func @transform_1(%arg0: i32) -> (i32, i32) {
    %c0_i32 = arith.constant 0 : i32
    %c0_i32_0 = arith.constant 0 : i32
    %c0_i32_1 = arith.constant 0 : i32
    return %c0_i32, %c0_i32_0 : i32, i32
  }
  func.func @transform_2(%arg0: i32) -> (i32, i32) {
    %c0_i32 = arith.constant 0 : i32
    %c0_i32_0 = arith.constant 0 : i32
    %c0_i32_1 = arith.constant 0 : i32
    return %c0_i32, %c0_i32_0 : i32, i32
  }
  func.func @transform_3(%arg0: i32) -> (i32, i32) {
    %c0_i32 = arith.constant 0 : i32
    %c0_i32_0 = arith.constant 0 : i32
    %c0_i32_1 = arith.constant 0 : i32
    return %c0_i32, %c0_i32_0 : i32, i32
  }
  func.func @transform_4(%arg0: i32) -> (i32, i32) {
    %c0_i32 = arith.constant 0 : i32
    %c0_i32_0 = arith.constant 0 : i32
    %c0_i32_1 = arith.constant 0 : i32
    return %c0_i32, %c0_i32_0 : i32, i32
  }
}

</mosaic_0001>

<llo_original>
// kernel: transformer_encoder_block.1
$region0: #{transformer_encoder_block.1}
  #allocation0 [shape = 'u32[]', space=smem, size = 0x4, offset = 0x4, fixed_abs, tag = 'smem constant byte address 0x4 - core index']
  #allocation1 [shape = 'u32[144,128]{1,0:T(1,128)}', space=vmem, size = 0x12000, scoped, tag = 'internal scratch']
  %s0 = inlined_call_operand.hbm [shape: f32[4,8,16], index: 0, kind: input, shape index: {}]
  %s1 = inlined_call_operand.hbm [shape: f32[16,48], index: 1, kind: input, shape index: {}]
  %s2 = inlined_call_operand.hbm [shape: f32[16,16], index: 2, kind: input, shape index: {}]
  %s3 = inlined_call_operand.hbm [shape: f32[6,16], index: 3, kind: input, shape index: {}]
  %s4 = inlined_call_operand.vmem [shape: f32[8,1], index: 4, kind: output, shape index: {}]
  %s5 = sld [smem:[#allocation0]]
  $region42: #{transformer_encoder_block.1} parent=0
    _
  %s7 = ssub.s32 1, %s5
  %s8 = scalar_select 0, %s7, %s5
  $region1: #{transformer_encoder_block.1} parent=0
    #allocation2 [shape = 'u8[4096]{0}', space=vmem, size = 0x1000, scoped, tag = 'input window, operand 0, single buffered']
    #allocation3 [shape = 's32[1]{0}', space=sflag, size = 0x4, scoped, tag = 'scoped memory for transformer_encoder_block.1']
    #allocation4 [shape = 'u8[8192]{0}', space=vmem, size = 0x2000, scoped, tag = 'input window, operand 1, single buffered']
    #allocation5 [shape = 's32[1]{0}', space=sflag, size = 0x4, scoped, tag = 'scoped memory for transformer_encoder_block.1']
    #allocation6 [shape = 'u8[8192]{0}', space=vmem, size = 0x2000, scoped, tag = 'input window, operand 2, single buffered']
    #allocation7 [shape = 'u8[4096]{0}', space=vmem, size = 0x1000, scoped, tag = 'input window, operand 3, single buffered']
    #allocation8 [shape = 's32[1]{0}', space=sflag, size = 0x4, scoped, tag = 'scoped memory for transformer_encoder_block.1']
    %9 = vsyncpa [#allocation3], 0
    %10 = vsyncpa [#allocation5], 0
    %11 = vsyncpa [#allocation8], 0
    // Predicated region
    $region2: #{transformer_encoder_block.1} parent=1 // pred_check
      _
    $region3: #{transformer_encoder_block.1} parent=1 // pred_check_branch
      %13 = sbr.rel (0) target = $region5
    $region4: #{transformer_encoder_block.1} parent=1 // pred_region
      %s15 = ssub.s32 128, 128
      %16 = vsyncadd [#allocation3], %s15
      %s17 = scalar_lea.hbm %s0, 384
      %s19 = sshll.u32 [#allocation2], 4
      %s20 = int_to_ptr.vmem [resolvable:$true] %s19
      %22 = dma.hbm_to_vmem [thread:$0]  %s17, 128, %s20, [#allocation3]
    $region5: #{transformer_encoder_block.1} parent=1 // pred_fallthru
      _
    // Predicated region
    $region6: #{transformer_encoder_block.1} parent=1 // pred_check
      _
    $region7: #{transformer_encoder_block.1} parent=1 // pred_check_branch
      %24 = sbr.rel (0) target = $region9
    $region8: #{transformer_encoder_block.1} parent=1 // pred_region
      %s26 = ssub.s32 256, 256
      %27 = vsyncadd [#allocation5], %s26
      %s28 = sshll.u32 [#allocation4], 4
      %s29 = int_to_ptr.vmem [resolvable:$true] %s28
      %34 = dma.hbm_to_vmem [thread:$0]  %s1, 256, %s29, [#allocation5], 128, 128, 8
    $region9: #{transformer_encoder_block.1} parent=1 // pred_fallthru
      _
    // Predicated region
    $region10: #{transformer_encoder_block.1} parent=1 // pred_check
      _
    $region11: #{transformer_encoder_block.1} parent=1 // pred_check_branch
      %36 = sbr.rel (0) target = $region13
    $region12: #{transformer_encoder_block.1} parent=1 // pred_region
      %s38 = ssub.s32 256, 256
      %39 = vsyncadd [#allocation5], %s38
      %s40 = sshll.u32 [#allocation6], 4
      %s41 = int_to_ptr.vmem [resolvable:$true] %s40
      %46 = dma.hbm_to_vmem [thread:$0]  %s2, 256, %s41, [#allocation5], 128, 128, 8
    $region13: #{transformer_encoder_block.1} parent=1 // pred_fallthru
      _
    // Predicated region
    $region14: #{transformer_encoder_block.1} parent=1 // pred_check
      _
    $region15: #{transformer_encoder_block.1} parent=1 // pred_check_branch
      %48 = sbr.rel (0) target = $region17
    $region16: #{transformer_encoder_block.1} parent=1 // pred_region
      %s50 = ssub.s32 128, 128
      %51 = vsyncadd [#allocation8], %s50
      %s53 = sshll.u32 [#allocation7], 4
      %s54 = int_to_ptr.vmem [resolvable:$true] %s53
      %56 = dma.hbm_to_vmem [thread:$0]  %s3, 128, %s54, [#allocation8]
    $region17: #{transformer_encoder_block.1} parent=1 // pred_fallthru
      _
    // Predicated region
    $region18: #{transformer_encoder_block.1} parent=1 // pred_check
      _
    $region19: #{transformer_encoder_block.1} parent=1 // pred_check_branch
      %58 = sbr.rel (0) target = $region21
    $region20: #{transformer_encoder_block.1} parent=1 // pred_region
      %59 = dma.done [#allocation3], 128
    $region21: #{transformer_encoder_block.1} parent=1 // pred_fallthru
      _
    // Predicated region
    $region22: #{transformer_encoder_block.1} parent=1 // pred_check
      _
    $region23: #{transformer_encoder_block.1} parent=1 // pred_check_branch
      %61 = sbr.rel (0) target = $region25
    $region24: #{transformer_encoder_block.1} parent=1 // pred_region
      %62 = dma.done [#allocation5], 256
    $region25: #{transformer_encoder_block.1} parent=1 // pred_fallthru
      _
    // Predicated region
    $region26: #{transformer_encoder_block.1} parent=1 // pred_check
      _
    $region27: #{transformer_encoder_block.1} parent=1 // pred_check_branch
      %64 = sbr.rel (0) target = $region29
    $region28: #{transformer_encoder_block.1} parent=1 // pred_region
      %65 = dma.done [#allocation5], 256
    $region29: #{transformer_encoder_block.1} parent=1 // pred_fallthru
      _
    // Predicated region
    $region30: #{transformer_encoder_block.1} parent=1 // pred_check
      _
    $region31: #{transformer_encoder_block.1} parent=1 // pred_check_branch
      %67 = sbr.rel (0) target = $region33
    $region32: #{transformer_encoder_block.1} parent=1 // pred_region
      %68 = dma.done [#allocation8], 128
    $region33: #{transformer_encoder_block.1} parent=1 // pred_fallthru
      _
    %v69 = vld [vmem:[#allocation2] sm:$0xff]
    %v70 = vld [vmem:[#allocation7] sm:$0x3f]
    %v71 = vld [vmem:[#allocation4] sm:$0xff]
    %v72 = vld [vmem:[#allocation4 + $0x8] sm:$0xff]
    %vm73 = vcmask 130048
    %v75 = vsel %vm73, %v69, 0
    %77 = vmatprep.subr.mxu0 0.0
    %78 = vmatpush1.msra.mxu0 0.0
    %79 = vmatprep.subr.mxu0 0.0
    %80 = vmatpush1.msra.mxu0 0.0
    %81 = vmatprep.subr.mxu0 0.0
    %82 = vmatpush1.msra.mxu0 0.0
    %83 = vmatprep.subr.mxu0 0.0
    %84 = vmatpush1.msra.mxu0 0.0
    %85 = vmatprep.subr.mxu0 0.0
    %86 = vmatpush1.msra.mxu0 0.0
    %87 = vmatprep.subr.mxu0 0.0
    %88 = vmatpush1.msra.mxu0 0.0
    %89 = vmatprep.subr.mxu0 0.0
    %90 = vmatpush1.msra.mxu0 0.0
    %91 = vmatprep.subr.mxu0 0.0
    %92 = vmatpush1.msra.mxu0 0.0
    %93 = vmatprep.subr.mxu0 0.0
    %94 = vmatpush1.msra.mxu0 0.0
    %95 = vmatprep.subr.mxu0 0.0
    %96 = vmatpush1.msra.mxu0 0.0
    %97 = vmatprep.subr.mxu0 0.0
    %98 = vmatpush1.msra.mxu0 0.0
    %99 = vmatprep.subr.mxu0 0.0
    %100 = vmatpush1.msra.mxu0 0.0
    %101 = vmatprep.subr.mxu0 0.0
    %102 = vmatpush1.msra.mxu0 0.0
    %103 = vmatprep.subr.mxu0 0.0
    %104 = vmatpush1.msra.mxu0 0.0
    %105 = vmatprep.subr.mxu0 0.0
    %106 = vmatpush1.msra.mxu0 %v72
    %107 = vmatprep.subr.mxu0 0.0
    %108 = vmatpush1.msra.mxu0 %v71
    %109 = vmatprep.subr.mxu0 0.0
    %110 = vmatpush2.msra.mxu0 0.0
    %111 = vmatprep.subr.mxu0 0.0
    %112 = vmatpush2.msra.mxu0 0.0
    %113 = vmatprep.subr.mxu0 0.0
    %114 = vmatpush2.msra.mxu0 0.0
    %115 = vmatprep.subr.mxu0 0.0
    %116 = vmatpush2.msra.mxu0 0.0
    %117 = vmatprep.subr.mxu0 0.0
    %118 = vmatpush2.msra.mxu0 0.0
    %119 = vmatprep.subr.mxu0 0.0
    %120 = vmatpush2.msra.mxu0 0.0
    %121 = vmatprep.subr.mxu0 0.0
    %122 = vmatpush2.msra.mxu0 0.0
    %123 = vmatprep.subr.mxu0 0.0
    %124 = vmatpush2.msra.mxu0 0.0
    %125 = vmatprep.subr.mxu0 0.0
    %126 = vmatpush2.msra.mxu0 0.0
    %127 = vmatprep.subr.mxu0 0.0
    %128 = vmatpush2.msra.mxu0 0.0
    %129 = vmatprep.subr.mxu0 0.0
    %130 = vmatpush2.msra.mxu0 0.0
    %131 = vmatprep.subr.mxu0 0.0
    %132 = vmatpush2.msra.mxu0 0.0
    %133 = vmatprep.subr.mxu0 0.0
    %134 = vmatpush2.msra.mxu0 0.0
    %135 = vmatprep.subr.mxu0 0.0
    %136 = vmatpush2.msra.mxu0 0.0
    %137 = vmatprep.subr.mxu0 0.0
    %138 = vmatpush2.msra.mxu0 0.0
    %139 = vmatprep.subr.mxu0 0.0
    %140 = vmatpush2.msra.mxu0 0.0
    %141 = vmatprep.mubr.f32.mxu0 0.0
    %142 = vmatmul.mubr.f32.gmra.mxu0 %v75
    %v143 = vpop.f32.mrf.mxu0
    %v144 = vadd.f32 0.0, %v143
    %v145 = vpop.f32.mrf.mxu0
    %146 = vdwg.mxu0
    %v147 = vlaneseq
    %v148 = vshrl.u32 %v147, 7
    %v149 = vsub.s32 0, %v148
    %v150 = vrot.slane %v70, %v149
    %v151 = vadd.f32 %v144, %v150
    %v152 = vlaneseq
    %v153 = vshrl.u32 %v152, 7
    %v154 = vsub.s32 1, %v153
    %v155 = vrot.slane %v70, %v154
    %157 = vrot.lane.b32.xlu0 %v155, 16
    %v158 = vpop.permute.xlu0 %157
    %v160 = vadd.f32 %v144, %v158
    %v161 = vlaneseq
    %v162 = vshrl.u32 %v161, 7
    %v163 = vsub.s32 2, %v162
    %v164 = vrot.slane %v70, %v163
    %166 = vrot.lane.b32.xlu0 %v164, 32
    %v167 = vpop.permute.xlu0 %166
    %v169 = vadd.f32 %v144, %v167
    %171 = vrot.lane.b32.xlu0 %v160, 112
    %v172 = vpop.permute.xlu0 %171
    %v174 = vsel %vm73, %v151, 0
    %v176 = vsel %vm73, %v172, 0
    %178 = vmatprep.subr.mxu0 0.0
    %179 = vmatpush1.xpose.msra.mxu0 0.0
    %180 = vmatprep.subr.mxu0 0.0
    %181 = vmatpush1.xpose.msra.mxu0 0.0
    %182 = vmatprep.subr.mxu0 0.0
    %183 = vmatpush1.xpose.msra.mxu0 0.0
    %184 = vmatprep.subr.mxu0 0.0
    %185 = vmatpush1.xpose.msra.mxu0 0.0
    %186 = vmatprep.subr.mxu0 0.0
    %187 = vmatpush1.xpose.msra.mxu0 0.0
    %188 = vmatprep.subr.mxu0 0.0
    %189 = vmatpush1.xpose.msra.mxu0 0.0
    %190 = vmatprep.subr.mxu0 0.0
    %191 = vmatpush1.xpose.msra.mxu0 0.0
    %192 = vmatprep.subr.mxu0 0.0
    %193 = vmatpush1.xpose.msra.mxu0 0.0
    %194 = vmatprep.subr.mxu0 0.0
    %195 = vmatpush1.xpose.msra.mxu0 0.0
    %196 = vmatprep.subr.mxu0 0.0
    %197 = vmatpush1.xpose.msra.mxu0 0.0
    %198 = vmatprep.subr.mxu0 0.0
    %199 = vmatpush1.xpose.msra.mxu0 0.0
    %200 = vmatprep.subr.mxu0 0.0
    %201 = vmatpush1.xpose.msra.mxu0 0.0
    %202 = vmatprep.subr.mxu0 0.0
    %203 = vmatpush1.xpose.msra.mxu0 0.0
    %204 = vmatprep.subr.mxu0 0.0
    %205 = vmatpush1.xpose.msra.mxu0 0.0
    %206 = vmatprep.subr.mxu0 0.0
    %207 = vmatpush1.xpose.msra.mxu0 0.0
    %208 = vmatprep.subr.mxu0 0.0
    %209 = vmatpush1.xpose.msra.mxu0 %v176
    %210 = vmatprep.subr.mxu0 0.0
    %211 = vmatpush2.xpose.msra.mxu0 0.0
    %212 = vmatprep.subr.mxu0 0.0
    %213 = vmatpush2.xpose.msra.mxu0 0.0
    %214 = vmatprep.subr.mxu0 0.0
    %215 = vmatpush2.xpose.msra.mxu0 0.0
    %216 = vmatprep.subr.mxu0 0.0
    %217 = vmatpush2.xpose.msra.mxu0 0.0
    %218 = vmatprep.subr.mxu0 0.0
    %219 = vmatpush2.xpose.msra.mxu0 0.0
    %220 = vmatprep.subr.mxu0 0.0
    %221 = vmatpush2.xpose.msra.mxu0 0.0
    %222 = vmatprep.subr.mxu0 0.0
    %223 = vmatpush2.xpose.msra.mxu0 0.0
    %224 = vmatprep.subr.mxu0 0.0
    %225 = vmatpush2.xpose.msra.mxu0 0.0
    %226 = vmatprep.subr.mxu0 0.0
    %227 = vmatpush2.xpose.msra.mxu0 0.0
    %228 = vmatprep.subr.mxu0 0.0
    %229 = vmatpush2.xpose.msra.mxu0 0.0
    %230 = vmatprep.subr.mxu0 0.0
    %231 = vmatpush2.xpose.msra.mxu0 0.0
    %232 = vmatprep.subr.mxu0 0.0
    %233 = vmatpush2.xpose.msra.mxu0 0.0
    %234 = vmatprep.subr.mxu0 0.0
    %235 = vmatpush2.xpose.msra.mxu0 0.0
    %236 = vmatprep.subr.mxu0 0.0
    %237 = vmatpush2.xpose.msra.mxu0 0.0
    %238 = vmatprep.subr.mxu0 0.0
    %239 = vmatpush2.xpose.msra.mxu0 0.0
    %240 = vmatprep.subr.mxu0 0.0
    %241 = vmatpush2.xpose.msra.mxu0 0.0
    %242 = vmatprep.mubr.f32.mxu0 0.0
    %243 = vmatmul.mubr.f32.gmra.mxu0 %v174
    %v244 = vpop.f32.mrf.mxu0
    %v245 = vadd.f32 0.0, %v244
    %v246 = vpop.f32.mrf.mxu0
    %247 = vdwg.mxu0
    %vm248 = vcmask 64512
    %v249 = vsel %vm248, %v245, -inf
    %250 = vmax.xlane.f32.xlu0 %v249
    %v251 = vpop.xlane.xlu0 %250
    %v252 = vsub.f32 %v245, %v251
    %v253 = vmul.f32 %v252, 1.442695
    %v254 = vpow.pop %v253
    %v255 = vsel %vm248, %v254, 0.0
    %256 = vadd.xlane.f32.xlu0 %v255
    %v257 = vpop.xlane.xlu0 %256
    %v258 = vrcp.pop %v257
    %v259 = vmul.f32 %v254, %v258
    %261 = vrot.lane.b32.xlu0 %v169, 96
    %v262 = vpop.permute.xlu0 %261
    %v265 = vsel %vm248, %v259, 0
    %267 = vmatprep.subr.mxu0 0.0
    %268 = vmatpush1.msra.mxu0 0.0
    %269 = vmatprep.subr.mxu0 0.0
    %270 = vmatpush1.msra.mxu0 0.0
    %271 = vmatprep.subr.mxu0 0.0
    %272 = vmatpush1.msra.mxu0 0.0
    %273 = vmatprep.subr.mxu0 0.0
    %274 = vmatpush1.msra.mxu0 0.0
    %275 = vmatprep.subr.mxu0 0.0
    %276 = vmatpush1.msra.mxu0 0.0
    %277 = vmatprep.subr.mxu0 0.0
    %278 = vmatpush1.msra.mxu0 0.0
    %279 = vmatprep.subr.mxu0 0.0
    %280 = vmatpush1.msra.mxu0 0.0
    %281 = vmatprep.subr.mxu0 0.0
    %282 = vmatpush1.msra.mxu0 0.0
    %283 = vmatprep.subr.mxu0 0.0
    %284 = vmatpush1.msra.mxu0 0.0
    %285 = vmatprep.subr.mxu0 0.0
    %286 = vmatpush1.msra.mxu0 0.0
    %287 = vmatprep.subr.mxu0 0.0
    %288 = vmatpush1.msra.mxu0 0.0
    %289 = vmatprep.subr.mxu0 0.0
    %290 = vmatpush1.msra.mxu0 0.0
    %291 = vmatprep.subr.mxu0 0.0
    %292 = vmatpush1.msra.mxu0 0.0
    %293 = vmatprep.subr.mxu0 0.0
    %294 = vmatpush1.msra.mxu0 0.0
    %295 = vmatprep.subr.mxu0 0.0
    %296 = vmatpush1.msra.mxu0 0.0
    %297 = vmatprep.subr.mxu0 0.0
    %298 = vmatpush1.msra.mxu0 %v262
    %299 = vmatprep.subr.mxu0 0.0
    %300 = vmatpush2.msra.mxu0 0.0
    %301 = vmatprep.subr.mxu0 0.0
    %302 = vmatpush2.msra.mxu0 0.0
    %303 = vmatprep.subr.mxu0 0.0
    %304 = vmatpush2.msra.mxu0 0.0
    %305 = vmatprep.subr.mxu0 0.0
    %306 = vmatpush2.msra.mxu0 0.0
    %307 = vmatprep.subr.mxu0 0.0
    %308 = vmatpush2.msra.mxu0 0.0
    %309 = vmatprep.subr.mxu0 0.0
    %310 = vmatpush2.msra.mxu0 0.0
    %311 = vmatprep.subr.mxu0 0.0
    %312 = vmatpush2.msra.mxu0 0.0
    %313 = vmatprep.subr.mxu0 0.0
    %314 = vmatpush2.msra.mxu0 0.0
    %315 = vmatprep.subr.mxu0 0.0
    %316 = vmatpush2.msra.mxu0 0.0
    %317 = vmatprep.subr.mxu0 0.0
    %318 = vmatpush2.msra.mxu0 0.0
    %319 = vmatprep.subr.mxu0 0.0
    %320 = vmatpush2.msra.mxu0 0.0
    %321 = vmatprep.subr.mxu0 0.0
    %322 = vmatpush2.msra.mxu0 0.0
    %323 = vmatprep.subr.mxu0 0.0
    %324 = vmatpush2.msra.mxu0 0.0
    %325 = vmatprep.subr.mxu0 0.0
    %326 = vmatpush2.msra.mxu0 0.0
    %327 = vmatprep.subr.mxu0 0.0
    %328 = vmatpush2.msra.mxu0 0.0
    %329 = vmatprep.subr.mxu0 0.0
    %330 = vmatpush2.msra.mxu0 0.0
    %331 = vmatprep.mubr.f32.mxu0 0.0
    %332 = vmatmul.mubr.f32.gmra.mxu0 %v265
    %v333 = vpop.f32.mrf.mxu0
    %v334 = vadd.f32 0.0, %v333
    %v335 = vpop.f32.mrf.mxu0
    %336 = vdwg.mxu0
    %v337 = vld [vmem:[#allocation6] sm:$0xff]
    %v338 = vld [vmem:[#allocation6 + $0x8] sm:$0xff]
    %v339 = vlaneseq
    %v340 = vshrl.u32 %v339, 7
    %v341 = vsub.s32 3, %v340
    %v342 = vrot.slane %v70, %v341
    %v344 = vsel %vm73, %v334, 0
    %346 = vmatprep.subr.mxu0 0.0
    %347 = vmatpush1.msra.mxu0 0.0
    %348 = vmatprep.subr.mxu0 0.0
    %349 = vmatpush1.msra.mxu0 0.0
    %350 = vmatprep.subr.mxu0 0.0
    %351 = vmatpush1.msra.mxu0 0.0
    %352 = vmatprep.subr.mxu0 0.0
    %353 = vmatpush1.msra.mxu0 0.0
    %354 = vmatprep.subr.mxu0 0.0
    %355 = vmatpush1.msra.mxu0 0.0
    %356 = vmatprep.subr.mxu0 0.0
    %357 = vmatpush1.msra.mxu0 0.0
    %358 = vmatprep.subr.mxu0 0.0
    %359 = vmatpush1.msra.mxu0 0.0
    %360 = vmatprep.subr.mxu0 0.0
    %361 = vmatpush1.msra.mxu0 0.0
    %362 = vmatprep.subr.mxu0 0.0
    %363 = vmatpush1.msra.mxu0 0.0
    %364 = vmatprep.subr.mxu0 0.0
    %365 = vmatpush1.msra.mxu0 0.0
    %366 = vmatprep.subr.mxu0 0.0
    %367 = vmatpush1.msra.mxu0 0.0
    %368 = vmatprep.subr.mxu0 0.0
    %369 = vmatpush1.msra.mxu0 0.0
    %370 = vmatprep.subr.mxu0 0.0
    %371 = vmatpush1.msra.mxu0 0.0
    %372 = vmatprep.subr.mxu0 0.0
    %373 = vmatpush1.msra.mxu0 0.0
    %374 = vmatprep.subr.mxu0 0.0
    %375 = vmatpush1.msra.mxu0 %v338
    %376 = vmatprep.subr.mxu0 0.0
    %377 = vmatpush1.msra.mxu0 %v337
    %378 = vmatprep.subr.mxu0 0.0
    %379 = vmatpush2.msra.mxu0 0.0
    %380 = vmatprep.subr.mxu0 0.0
    %381 = vmatpush2.msra.mxu0 0.0
    %382 = vmatprep.subr.mxu0 0.0
    %383 = vmatpush2.msra.mxu0 0.0
    %384 = vmatprep.subr.mxu0 0.0
    %385 = vmatpush2.msra.mxu0 0.0
    %386 = vmatprep.subr.mxu0 0.0
    %387 = vmatpush2.msra.mxu0 0.0
    %388 = vmatprep.subr.mxu0 0.0
    %389 = vmatpush2.msra.mxu0 0.0
    %390 = vmatprep.subr.mxu0 0.0
    %391 = vmatpush2.msra.mxu0 0.0
    %392 = vmatprep.subr.mxu0 0.0
    %393 = vmatpush2.msra.mxu0 0.0
    %394 = vmatprep.subr.mxu0 0.0
    %395 = vmatpush2.msra.mxu0 0.0
    %396 = vmatprep.subr.mxu0 0.0
    %397 = vmatpush2.msra.mxu0 0.0
    %398 = vmatprep.subr.mxu0 0.0
    %399 = vmatpush2.msra.mxu0 0.0
    %400 = vmatprep.subr.mxu0 0.0
    %401 = vmatpush2.msra.mxu0 0.0
    %402 = vmatprep.subr.mxu0 0.0
    %403 = vmatpush2.msra.mxu0 0.0
    %404 = vmatprep.subr.mxu0 0.0
    %405 = vmatpush2.msra.mxu0 0.0
    %406 = vmatprep.subr.mxu0 0.0
    %407 = vmatpush2.msra.mxu0 0.0
    %408 = vmatprep.subr.mxu0 0.0
    %409 = vmatpush2.msra.mxu0 0.0
    %410 = vmatprep.mubr.f32.mxu0 0.0
    %411 = vmatmul.mubr.f32.gmra.mxu0 %v344
    %v412 = vpop.f32.mrf.mxu0
    %v413 = vadd.f32 %v342, %v412
    %v414 = vpop.f32.mrf.mxu0
    %415 = vdwg.mxu0
    %v416 = vadd.f32 %v413, %v69
    %v417 = vsel %vm73, %v416, 0.0
    %418 = vadd.xlane.f32.xlu0 %v417
    %v419 = vpop.xlane.xlu0 %418
    %v420 = vrcp.pop 16.0
    %v421 = vmul.f32 %v419, %v420
    %v422 = vsub.f32 %v416, %v421
    %v423 = vmul.f32 %v422, %v422
    %v424 = vsel %vm73, %v423, 0.0
    %425 = vadd.xlane.f32.xlu0 %v424
    %v426 = vpop.xlane.xlu0 %425
    %v427 = vmul.f32 %v426, %v420
    %v428 = vlaneseq
    %v429 = vshrl.u32 %v428, 7
    %v430 = vsub.s32 4, %v429
    %v431 = vrot.slane %v70, %v430
    %v432 = vmul.f32 %v422, %v431
    %v433 = vsel %vm73, %v432, 0.0
    %434 = vadd.xlane.f32.xlu0 %v433
    %v435 = vpop.xlane.xlu0 %434
    %v436 = vadd.f32 %v427, 1e-05
    %v437 = vrsqrt.pop %v436
    %v438 = vmul.f32 %v435, %v437
    %v439 = vlaneseq
    %v440 = vshrl.u32 %v439, 7
    %v441 = vsub.s32 5, %v440
    %v442 = vrot.slane %v70, %v441
    %v443 = vadd.f32 %v438, %v442
    %vm444 = vcmask 7168
    %445 = vst.msk [vmem:[%s4] sm:$0xff] %vm444, %v443
    // Predicated region
    $region34: #{transformer_encoder_block.1} parent=1 // pred_check
      _
    $region35: #{transformer_encoder_block.1} parent=1 // pred_check_branch
      %447 = sbr.rel (0) target = $region37
    $region36: #{transformer_encoder_block.1} parent=1 // pred_region
      _
    $region37: #{transformer_encoder_block.1} parent=1 // pred_fallthru
      _
    // Predicated region
    $region38: #{transformer_encoder_block.1} parent=1 // pred_check
      _
    $region39: #{transformer_encoder_block.1} parent=1 // pred_check_branch
      %449 = sbr.rel (0) target = $region41
    $region40: #{transformer_encoder_block.1} parent=1 // pred_region
      _
    $region41: #{transformer_encoder_block.1} parent=1 // pred_fallthru
      _
    %450 = vsyncpa [#allocation3], 1
    %451 = vsyncpa [#allocation5], 1
    %452 = vsyncpa [#allocation8], 1

</llo_original>
